<compile_context>
chip_gen: v7x
topology: tpu7x:2x2x1
jax: 0.10.0
libtpu: 0.0.40
codegen_flags: <defaults>
</compile_context>

<pallas_src>
import math

import jax
import jax.numpy as jnp
from jax.experimental import pallas as pl
from jax.experimental.pallas import tpu as pltpu

_LANE = 128
_SUBLANE = 8


def _rup(x, m):
    return ((x + m - 1) // m) * m


def _vmem_budget_and_limit():
    """Generation-aware scoped-VMEM limit + the share the tile picker may use.

    v5e/v6e have 128 MiB physical VMEM (default scoped limit only 16/32 MiB); v7x has
    64 MiB per TensorCore.  Request ~3/4 of physical as the scoped limit (capped at
    96 MiB) and let the tile picker consume ~half of it, leaving headroom for
    compiler-internal scratch / spills."""
    cap = 64 * 1024 * 1024
    try:
        info = pltpu.get_tpu_info()
        cap = int(getattr(info, "vmem_capacity_bytes", cap)) or cap
    except Exception:
        pass  # assume the smallest (v7x) part
    limit = min((cap * 3) // 4, 96 * 1024 * 1024)
    budget = limit // 2
    return budget, limit


def _vmem_bytes_per_step(tr, L, C, DT, in_item, out_item):
    """Conservative per-grid-step VMEM working set.

    Accounts for lane(128)/sublane(8) padding of the narrow channel dims and for the
    in-kernel temporaries (two rolled input copies + ~two live f32 partial products)
    that do not appear in scratch_shapes."""
    l_pad = _rup(max(L, 1), _SUBLANE)
    c_pad = _rup(max(C, 1), _LANE)
    d_pad = _rup(max(DT, 1), _LANE)
    in_blk = tr * l_pad * c_pad * in_item
    out_blk = tr * l_pad * d_pad * out_item
    acc_blk = tr * l_pad * d_pad * 4                 # f32 accumulator-sized temporary
    pipelined = 2 * (in_blk + out_blk)               # double-buffered BlockSpec windows
    temps = 2 * in_blk + 2 * acc_blk                 # x_prev/x_next + live f32 partials
    w_blk = 2 * 3 * _rup(max(C, 1), _SUBLANE) * d_pad * in_item
    return pipelined + temps + w_blk


def _pick_row_tile(R, L, C, DT, in_item, out_item, vmem_budget):
    """Rows per grid step: as large as the VMEM budget allows (roofline-sized DMA blocks
    that amortize the ~0.35us fixed per-step overhead), while keeping several grid steps
    when R permits (pipeline overlap + v7x megacore sharding)."""
    fixed = _vmem_bytes_per_step(0, L, C, DT, in_item, out_item)
    per_row = max(1, _vmem_bytes_per_step(1, L, C, DT, in_item, out_item) - fixed)
    tr_vmem = max(1, (vmem_budget - fixed) // per_row)
    tr_target = max(1, 16384 // L)                   # aim for ~8-16K tokens per step
    tr = max(1, min(R, tr_vmem, tr_target))
    if R >= 2:
        chosen = None
        for steps in (8, 4, 2):                      # prefer >=4-8 grid steps ...
            cand = -(-R // steps)
            if cand * L >= 2048:                     # ... but not below ~2K tokens/step
                chosen = cand
                break
        if chosen is None:
            chosen = -(-R // 2)                      # always allow 2 steps (megacore)
        tr = min(tr, max(1, chosen))
    # Snap to a nearby divisor of R so the wrapper row pad / output slice become no-ops.
    for cand in range(tr, max(0, tr // 2), -1):
        if R % cand == 0:
            return cand
    return max(1, tr)


def _token_conv_kernel(x_ref, w_ref, o_ref):
    # x_ref: (TR, L, C)   w_ref: (3, C, DT)   o_ref: (TR, L, DT)
    tr, L, C = x_ref.shape
    dt = o_ref.shape[-1]
    x = x_ref[...]
    # Circular shifts along the sequence axis, applied per row (axis=1) so rows never
    # bleed into each other.  Static-shift jnp.roll lowers to slice+concat.
    x_prev = jnp.roll(x, 1, axis=1)                  # x[:, (t-1) % L, :]
    x_next = jnp.roll(x, -1, axis=1)                 # x[:, (t+1) % L, :]
    # Collapse rows into the matmul M dimension; when L % 8 == 0 this reshape is a pure
    # relabeling of the (sublane, lane) tiling (no relayout copy).  Three accumulated
    # matmuls avoid the lane-offset concatenate of the narrow-channel input entirely.
    m = tr * L
    y = jnp.dot(x_prev.reshape(m, C), w_ref[0], preferred_element_type=jnp.float32)
    y = y + jnp.dot(x.reshape(m, C), w_ref[1], preferred_element_type=jnp.float32)
    y = y + jnp.dot(x_next.reshape(m, C), w_ref[2], preferred_element_type=jnp.float32)
    o_ref[...] = y.reshape(tr, L, dt).astype(o_ref.dtype)


def all_token_embedding(x, weight):
    """x: (B, L, c_in) or (B, N, L, c_in); weight: (d_model, c_in, 3) as in nn.Conv1d."""
    d_model, c_in, k = weight.shape
    assert k == 3

    # (d_model, c_in, 3) -> (3, c_in, d_model): tap-major weight for the three matmuls.
    # Cast to x.dtype (for bf16 inputs this is mixed precision; accumulation stays f32).
    w = jnp.transpose(weight, (2, 1, 0)).astype(x.dtype)

    is_4d = (x.ndim == 4)
    if is_4d:
        B, N, L, C = x.shape
        xf = x.reshape(B * N, L, C)
    else:
        B, L, C = x.shape
        xf = x
    R = xf.shape[0]

    # Exact-width output (no 128-lane pad -> no 4x write amplification, no extra slice
    # pass).  For large, 256-divisible d_model add a second grid axis over d_model so the
    # per-step footprint stays small (v7x 64 MiB VMEM) while M (=TR*L) stays roofline-sized.
    if d_model >= 512 and d_model % 256 == 0:
        DT = 256
    else:
        DT = d_model
    ND = d_model // DT

    in_item = jnp.dtype(x.dtype).itemsize
    out_item = in_item
    budget, vmem_limit = _vmem_budget_and_limit()
    TR = _pick_row_tile(R, L, C, DT, in_item, out_item, budget)
    G = pl.cdiv(R, TR)
    R_pad = G * TR
    if R_pad != R:
        # Rows are independent; zero-padded rows produce zeros and are sliced off below.
        xf = jnp.pad(xf, ((0, R_pad - R), (0, 0), (0, 0)))

    flops = 2 * R_pad * L * 3 * c_in * d_model
    bytes_accessed = (R_pad * L * c_in * in_item
                      + R_pad * L * d_model * out_item
                      + 3 * c_in * d_model * in_item)

    out = pl.pallas_call(
        _token_conv_kernel,
        out_shape=jax.ShapeDtypeStruct((R_pad, L, d_model), x.dtype),
        grid_spec=pltpu.PrefetchScalarGridSpec(
            num_scalar_prefetch=0,
            grid=(G, ND),
            in_specs=[
                # Input block is invariant along the d_model axis -> DMA'd once per row tile.
                pl.BlockSpec((TR, L, C), lambda i, j: (i, 0, 0)),
                # Weight stays resident (tiny); tiled along d_model only when ND > 1.
                pl.BlockSpec((3, c_in, DT), lambda i, j: (0, 0, j)),
            ],
            out_specs=pl.BlockSpec((TR, L, DT), lambda i, j: (i, 0, j)),
        ),
        compiler_params=pltpu.CompilerParams(
            dimension_semantics=("parallel", "parallel"),
            vmem_limit_bytes=vmem_limit,
        ),
        cost_estimate=pl.CostEstimate(
            flops=flops, transcendentals=0, bytes_accessed=bytes_accessed),
    )(xf, w)

    if R_pad != R:
        out = out[:R]
    if is_4d:
        out = out.reshape(B, N, L, d_model)
    return out


def _reference(x, weight):
    # Pure-JAX reference of the circular conv (channels-last).
    w = jnp.transpose(weight, (2, 1, 0))             # (3, C, D)
    xp = jnp.roll(x, 1, axis=-2)
    xn = jnp.roll(x, -1, axis=-2)
    return xp @ w[0] + x @ w[1] + xn @ w[2]


if __name__ == "__main__":
    key = jax.random.PRNGKey(0)
    B, N, L = 2, 3, 16
    c_in, d_model = 4, 32

    k_x, k_w = jax.random.split(key)
    x4 = jax.random.normal(k_x, (B, N, L, c_in), dtype=jnp.float32)

    # Deterministic stand-in for kaiming_normal_(mode='fan_in', nonlinearity='leaky_relu'):
    # gain = sqrt(2), fan_in = c_in * kernel_size.
    fan_in = c_in * 3
    std = math.sqrt(2.0) / math.sqrt(fan_in)
    weight = std * jax.random.normal(k_w, (d_model, c_in, 3), dtype=jnp.float32)

    # 4D path (B, N, L, c_in)
    y4 = jax.block_until_ready(all_token_embedding(x4, weight))
    assert y4.shape == (B, N, L, d_model), y4.shape
    assert jnp.allclose(y4, _reference(x4, weight), atol=1e-5, rtol=1e-5), "4D mismatch"

    # 3D path (B, L, c_in)
    x3 = x4[:, 0]
    y3 = jax.block_until_ready(all_token_embedding(x3, weight))
    assert y3.shape == (B, L, d_model), y3.shape
    assert jnp.allclose(y3, _reference(x3, weight), atol=1e-5, rtol=1e-5), "3D mismatch"

    print("KERNEL_OK")
</pallas_src>

<mosaic_0001>
module attributes {stable_mosaic.version = 11 : i64} {
  func.func @_token_conv_kernel(%arg0: i32, %arg1: i32, %arg2: memref<3x16x4xf32, #tpu.memory_space<vmem>>, %arg3: memref<3x4x32xf32, #tpu.memory_space<vmem>>, %arg4: memref<3x16x32xf32, #tpu.memory_space<vmem>>) attributes {dimension_semantics = [#tpu.dimension_semantics<parallel>, #tpu.dimension_semantics<parallel>], iteration_bounds = array<i64: 2, 1>, scalar_prefetch = 0 : i64, scratch_operands = 0 : i64, tpu.core_type = #tpu.core_type<tc>, window_params = [{transform_indices = @transform_0, window_bounds = array<i64: 3, 16, 4>}, {transform_indices = @transform_1, window_bounds = array<i64: 3, 4, 32>}, {transform_indices = @transform_2, window_bounds = array<i64: 3, 16, 32>}]} {
    %c0 = arith.constant 0 : index
    %c0_0 = arith.constant 0 : index
    %c0_1 = arith.constant 0 : index
    %0 = vector.load %arg2[%c0, %c0_0, %c0_1] : memref<3x16x4xf32, #tpu.memory_space<vmem>>, vector<3x16x4xf32>
    %1 = vector.extract_strided_slice %0 {offsets = [0, 15, 0], sizes = [3, 1, 4], strides = [1, 1, 1]} : vector<3x16x4xf32> to vector<3x1x4xf32>
    %2 = vector.extract_strided_slice %0 {offsets = [0, 0, 0], sizes = [3, 15, 4], strides = [1, 1, 1]} : vector<3x16x4xf32> to vector<3x15x4xf32>
    %3 = tpu.concatenate %1, %2 in 1 : vector<3x1x4xf32>, vector<3x15x4xf32> -> vector<3x16x4xf32>
    %4 = vector.extract_strided_slice %0 {offsets = [0, 1, 0], sizes = [3, 15, 4], strides = [1, 1, 1]} : vector<3x16x4xf32> to vector<3x15x4xf32>
    %5 = vector.extract_strided_slice %0 {offsets = [0, 0, 0], sizes = [3, 1, 4], strides = [1, 1, 1]} : vector<3x16x4xf32> to vector<3x1x4xf32>
    %6 = tpu.concatenate %4, %5 in 1 : vector<3x15x4xf32>, vector<3x1x4xf32> -> vector<3x16x4xf32>
    %7 = vector.shape_cast %3 : vector<3x16x4xf32> to vector<48x4xf32>
    %c0_2 = arith.constant 0 : index
    %c0_3 = arith.constant 0 : index
    %c0_4 = arith.constant 0 : index
    %8 = vector.load %arg3[%c0_2, %c0_3, %c0_4] : memref<3x4x32xf32, #tpu.memory_space<vmem>>, vector<1x4x32xf32>
    %9 = vector.shape_cast %8 : vector<1x4x32xf32> to vector<4x32xf32>
    %cst = arith.constant dense<0.000000e+00> : vector<48x32xf32>
    %10 = tpu.matmul %7, %9, %cst {dimension_numbers = #tpu.dot_dimension_numbers<[1], [0], [0], [1], [0, 0, 1, 1], [], []>} : vector<48x4xf32>, vector<4x32xf32>, vector<48x32xf32> -> vector<48x32xf32>
    %11 = vector.shape_cast %0 : vector<3x16x4xf32> to vector<48x4xf32>
    %c1 = arith.constant 1 : index
    %c0_5 = arith.constant 0 : index
    %c0_6 = arith.constant 0 : index
    %12 = vector.load %arg3[%c1, %c0_5, %c0_6] : memref<3x4x32xf32, #tpu.memory_space<vmem>>, vector<1x4x32xf32>
    %13 = vector.shape_cast %12 : vector<1x4x32xf32> to vector<4x32xf32>
    %cst_7 = arith.constant dense<0.000000e+00> : vector<48x32xf32>
    %14 = tpu.matmul %11, %13, %cst_7 {dimension_numbers = #tpu.dot_dimension_numbers<[1], [0], [0], [1], [0, 0, 1, 1], [], []>} : vector<48x4xf32>, vector<4x32xf32>, vector<48x32xf32> -> vector<48x32xf32>
    %15 = arith.addf %10, %14 : vector<48x32xf32>
    %16 = vector.shape_cast %6 : vector<3x16x4xf32> to vector<48x4xf32>
    %c2 = arith.constant 2 : index
    %c0_8 = arith.constant 0 : index
    %c0_9 = arith.constant 0 : index
    %17 = vector.load %arg3[%c2, %c0_8, %c0_9] : memref<3x4x32xf32, #tpu.memory_space<vmem>>, vector<1x4x32xf32>
    %18 = vector.shape_cast %17 : vector<1x4x32xf32> to vector<4x32xf32>
    %cst_10 = arith.constant dense<0.000000e+00> : vector<48x32xf32>
    %19 = tpu.matmul %16, %18, %cst_10 {dimension_numbers = #tpu.dot_dimension_numbers<[1], [0], [0], [1], [0, 0, 1, 1], [], []>} : vector<48x4xf32>, vector<4x32xf32>, vector<48x32xf32> -> vector<48x32xf32>
    %20 = arith.addf %15, %19 : vector<48x32xf32>
    %21 = vector.shape_cast %20 : vector<48x32xf32> to vector<3x16x32xf32>
    %c0_11 = arith.constant 0 : index
    %c0_12 = arith.constant 0 : index
    %c0_13 = arith.constant 0 : index
    %22 = vector.load %arg4[%c0_11, %c0_12, %c0_13] : memref<3x16x32xf32, #tpu.memory_space<vmem>>, vector<3x16x32xf32>
    tpu.vector_store %arg4[%c0_11, %c0_12, %c0_13], %21 {strides = array<i32>} : memref<3x16x32xf32, #tpu.memory_space<vmem>>, vector<3x16x32xf32>,
    return
  }
  func.func @transform_0(%arg0: i32, %arg1: i32) -> (i32, i32, i32) {
    %c0_i32 = arith.constant 0 : i32
    %c0_i32_0 = arith.constant 0 : i32
    %c0_i32_1 = arith.constant 0 : i32
    return %arg0, %c0_i32, %c0_i32_0 : i32, i32, i32
  }
  func.func @transform_1(%arg0: i32, %arg1: i32) -> (i32, i32, i32) {
    %c0_i32 = arith.constant 0 : i32
    %c0_i32_0 = arith.constant 0 : i32
    %c0_i32_1 = arith.constant 0 : i32
    return %c0_i32, %c0_i32_0, %arg1 : i32, i32, i32
  }
  func.func @transform_2(%arg0: i32, %arg1: i32) -> (i32, i32, i32) {
    %c0_i32 = arith.constant 0 : i32
    %c0_i32_0 = arith.constant 0 : i32
    return %arg0, %c0_i32, %arg1 : i32, i32, i32
  }
}

</mosaic_0001>

<llo_original>
// kernel: tpu_custom_call.1
$region0: #{tpu_custom_call.1}
  #allocation0 [shape = 'u32[]', space=smem, size = 0x4, offset = 0x4, fixed_abs, tag = 'smem constant byte address 0x4 - core index']
  #allocation1 [shape = 'u32[144,128]{1,0:T(1,128)}', space=vmem, size = 0x12000, scoped, tag = 'internal scratch']
  %s0 = inlined_call_operand.vmem [shape: f32[6,16,4], index: 0, kind: input, shape index: {}]
  %s1 = inlined_call_operand.vmem [shape: f32[3,4,32], index: 1, kind: input, shape index: {}]
  %s2 = inlined_call_operand.hbm [shape: f32[6,16,32], index: 2, kind: output, shape index: {}]
  %s3 = sld [smem:[#allocation0]]
  $region41: #{tpu_custom_call.1} parent=0
    _
  %s5 = ssub.s32 1, %s3
  %s6 = scalar_select 0, %s5, %s3
  $region1: #{tpu_custom_call.1} parent=0
    #allocation2 [shape = 'u8[49152]{0}', space=vmem, size = 0xc000, scoped, tag = 'output window, operand 0']
    #allocation3 [shape = 's32[2]{0}', space=sflag, size = 0x8, scoped, tag = 'scoped memory for tpu_custom_call.1']
    %7 = vsyncpa [#allocation3], 0
    %s8 = scalar_lea.sflag [#allocation3], 1
    %9 = vsyncpa %s8, 0
    loop: start=0, step=1, limit=4
    $region2: #{tpu_custom_call.1} parent=1 // loop_pre_header
      _
    $region3: #{tpu_custom_call.1} parent=1 // loop_header
      %s11 = sphi 0, %s15
      %p12 = scmp.ge.s32.totalorder %s11, 4
      %s18 = sphi 0, %s30
      %s19 = sphi 0, %s26
      %s20 = sphi 0, %s18
      %s21 = sphi 0, %s19
      %s22 = sphi 0, %s20
      %s23 = sphi 0, %s21
      %s33 = sphi 0, %s35
      %s36 = sphi 0, %s33
      %s37 = sphi 0, %s36
      %s53 = sphi 0, %s37
      %s59 = sphi 0, %s61
      %s62 = sphi 0, %s59
      %s63 = sphi 0, %s62
      %s79 = sphi 0, %s63
      %s87 = sphi 0, %s89
      %s90 = sphi 0, %s87
      %s91 = sphi 0, %s90
      %s107 = sphi 0, %s91
    $region4: #{tpu_custom_call.1} parent=1 // loop_header_branch
      %14 = sbr.rel (%p12) target = $region8
    $region5: #{tpu_custom_call.1} parent=1 // loop_body
      %s16 = ssub.s32 %s11, 1
      %s17 = ssub.s32 %s11, 2
      %s24 = sadd.s32 1, %s19
      %p25 = scmp.ge.s32.totalorder %s24, 1
      %s26 = scalar_select %p25, 0, %s24
      %s27 = sadd.s32 1, %s18
      %s28 = scalar_select %p25, %s27, %s18
      %p29 = scmp.ge.s32.totalorder %s28, 2
      %s30 = scalar_select %p29, 0, %s28
      %s31 = ssub.s32 %s18, %s30
      %p32 = scmp.eq.s32.totalorder %s31, 0
      %s34 = sadd.s32 %s33, 1
      %s35 = scalar_select %p32, %s33, %s34
      %p38 = pneg %p32
      %p39 = scmp.eq.s32.totalorder %s11, 1
      %p40 = por %p38, %p39
      %p41 = scmp.ne.s32.totalorder %s33, %s36
      %p42 = scmp.eq.s32.totalorder %s11, 0
      %p43 = por %p41, %p42
      %p44 = scmp.ne.s32.totalorder %s33, %s36
      %p45 = scmp.eq.s32.totalorder %s16, 1
      %p46 = por %p44, %p45
      %p47 = scmp.ne.s32.totalorder %s36, %s37
      %p48 = scmp.eq.s32.totalorder %s16, 0
      %p49 = por %p47, %p48
      %p50 = scmp.ne.s32.totalorder %s36, %s37
      %p51 = scmp.eq.s32.totalorder %s17, 1
      %p52 = por %p50, %p51
      %p54 = scmp.ne.s32.totalorder %s37, %s53
      %p55 = scmp.eq.s32.totalorder %s17, 0
      %p56 = por %p54, %p55
      %s57 = ssub.s32 %s19, %s26
      %p58 = scmp.eq.s32.totalorder %s57, 0
      %s60 = sadd.s32 %s59, 1
      %s61 = scalar_select %p58, %s59, %s60
      %p64 = pneg %p58
      %p65 = scmp.eq.s32.totalorder %s11, 1
      %p66 = por %p64, %p65
      %p67 = scmp.ne.s32.totalorder %s59, %s62
      %p68 = scmp.eq.s32.totalorder %s11, 0
      %p69 = por %p67, %p68
      %p70 = scmp.ne.s32.totalorder %s59, %s62
      %p71 = scmp.eq.s32.totalorder %s16, 1
      %p72 = por %p70, %p71
      %p73 = scmp.ne.s32.totalorder %s62, %s63
      %p74 = scmp.eq.s32.totalorder %s16, 0
      %p75 = por %p73, %p74
      %p76 = scmp.ne.s32.totalorder %s62, %s63
      %p77 = scmp.eq.s32.totalorder %s17, 1
      %p78 = por %p76, %p77
      %p80 = scmp.ne.s32.totalorder %s63, %s79
      %p81 = scmp.eq.s32.totalorder %s17, 0
      %p82 = por %p80, %p81
      %s83 = ssub.s32 %s18, %s30
      %s84 = ssub.s32 %s19, %s26
      %s85 = sor.u32 %s83, %s84
      %p86 = scmp.eq.s32.totalorder %s85, 0
      %s88 = sadd.s32 %s87, 1
      %s89 = scalar_select %p86, %s87, %s88
      %p92 = pneg %p86
      %p93 = scmp.eq.s32.totalorder %s11, 1
      %p94 = por %p92, %p93
      %p95 = scmp.ne.s32.totalorder %s87, %s90
      %p96 = scmp.eq.s32.totalorder %s11, 0
      %p97 = por %p95, %p96
      %p98 = scmp.ne.s32.totalorder %s87, %s90
      %p99 = scmp.eq.s32.totalorder %s16, 1
      %p100 = por %p98, %p99
      %p101 = scmp.ne.s32.totalorder %s90, %s91
      %p102 = scmp.eq.s32.totalorder %s16, 0
      %p103 = por %p101, %p102
      %p104 = scmp.ne.s32.totalorder %s90, %s91
      %p105 = scmp.eq.s32.totalorder %s17, 1
      %p106 = por %p104, %p105
      %p108 = scmp.ne.s32.totalorder %s91, %s107
      %p109 = scmp.eq.s32.totalorder %s17, 0
      %p110 = por %p108, %p109
      %p111 = scmp.le.s32.totalorder 1, %s11
      %p112 = scmp.lt.s32.totalorder %s11, 3
      %p113 = pnand %p111, %p112
      %p114 = pneg %p113
      // Predicated region
      $region9: #{tpu_custom_call.1} parent=5 // pred_check
        _
      $region10: #{tpu_custom_call.1} parent=5 // pred_check_branch
        %116 = sbr.rel (%p113) target = $region12
      $region11: #{tpu_custom_call.1} parent=5 // pred_region
        %s117 = ssub.s32 %s11, 1
        // Predicated region
        $region13: #{tpu_custom_call.1} parent=11 // pred_check
          %p118 = pneg %p75
        $region14: #{tpu_custom_call.1} parent=11 // pred_check_branch
          %120 = sbr.rel (%p118) target = $region16
        $region15: #{tpu_custom_call.1} parent=11 // pred_region
          %p121 = scmp.lt.s32.totalorder %s21, 0
          %s122 = scalar_select %p121, %s21, 0
          %s123 = smul.addr %s122, 4
          %s124 = scalar_lea.vmem %s1, %s123
        $region16: #{tpu_custom_call.1} parent=11 // pred_fallthru
          _
      $region12: #{tpu_custom_call.1} parent=5 // pred_fallthru
        _
      %p125 = scmp.lt.s32.totalorder %s11, 2
      // Predicated region
      $region17: #{tpu_custom_call.1} parent=5 // pred_check
        %p126 = pneg %p125
      $region18: #{tpu_custom_call.1} parent=5 // pred_check_branch
        %128 = sbr.rel (%p126) target = $region20
      $region19: #{tpu_custom_call.1} parent=5 // pred_region
        // Predicated region
        $region21: #{tpu_custom_call.1} parent=19 // pred_check
          %p129 = pneg %p43
        $region22: #{tpu_custom_call.1} parent=19 // pred_check_branch
          %131 = sbr.rel (%p129) target = $region24
        $region23: #{tpu_custom_call.1} parent=19 // pred_region
          %s132 = smul.u32 3, %s18
          %p133 = scmp.lt.s32.totalorder %s132, 5
          %s134 = scalar_select %p133, %s132, 5
          %s135 = smul.addr %s134, 2
          %s136 = smul.addr %s135, 8
          %s137 = scalar_lea.vmem %s0, %s136
          %s138 = smul.u32 3, %s18
        $region24: #{tpu_custom_call.1} parent=19 // pred_fallthru
          _
      $region20: #{tpu_custom_call.1} parent=5 // pred_fallthru
        _
      %p139 = scmp.le.s32.totalorder 1, %s11
      %p140 = scmp.lt.s32.totalorder %s11, 3
      %p141 = pnand %p139, %p140
      %p142 = pneg %p141
      // Predicated region
      $region25: #{tpu_custom_call.1} parent=5 // pred_check
        _
      $region26: #{tpu_custom_call.1} parent=5 // pred_check_branch
        %144 = sbr.rel (%p141) target = $region28
      $region27: #{tpu_custom_call.1} parent=5 // pred_region
        %s145 = ssub.s32 %s11, 1
        %s146 = smul.u32 3, %s20
        %p147 = scmp.lt.s32.totalorder %s146, 5
        %s148 = scalar_select %p147, %s146, 5
        %s149 = smul.addr %s148, 2
        %s150 = smul.addr %s149, 8
        %s151 = scalar_lea.vmem %s0, %s150
        %p152 = pneg %p49
        %p153 = pneg %p46
        %p154 = scmp.lt.s32.totalorder %s21, 0
        %s155 = scalar_select %p154, %s21, 0
        %s156 = smul.addr %s155, 4
        %s157 = scalar_lea.vmem %s1, %s156
        %p158 = pneg %p75
        %p159 = pneg %p72
        %p160 = pneg %p103
        %p161 = pneg %p100
        %s162 = sand.u32 %s90, 1
        %s163 = scalar_lea.sflag [#allocation3], %s162
        %s164 = sand.u32 %s90, 1
        %s165 = smul.addr %s164, 48
        %s166 = scalar_lea.vmem [#allocation2], %s165
        %s167 = smul.u32 3, %s20
        %p168 = scmp.lt.s32.totalorder %s167, 5
        %s169 = scalar_select %p168, %s167, 5
        %s170 = smul.addr %s169, 2
        %s171 = smul.addr %s170, 8
        %s172 = scalar_lea.vmem %s0, %s171
        %s173 = smul.u32 3, %s20
        %p174 = scmp.lt.s32.totalorder %s21, 0
        %s175 = scalar_select %p174, %s21, 0
        %s176 = smul.addr %s175, 4
        %s177 = scalar_lea.vmem %s1, %s176
        %s178 = smul.u32 3, %s20
        %v179 = vld [vmem:[%s172] sm:$0xff]
        %v180 = vld [vmem:[%s172 + $0x8] sm:$0xff]
        %v181 = vld [vmem:[%s172 + $0x10] sm:$0xff]
        %v182 = vld [vmem:[%s172 + $0x18] sm:$0xff]
        %v183 = vld [vmem:[%s172 + $0x20] sm:$0xff]
        %v184 = vld [vmem:[%s172 + $0x28] sm:$0xff]
        %v188 = vrot.slane %v180, 7
        %v189 = vrot.slane %v182, 7
        %v190 = vrot.slane %v184, 7
        %vm197 = vcmask 1040384
        %v198 = vrot.slane %v179, 7
        %v199 = vsel %vm197, %v198, %v188
        %v200 = vrot.slane %v181, 7
        %v201 = vsel %vm197, %v200, %v189
        %v202 = vrot.slane %v183, 7
        %v203 = vsel %vm197, %v202, %v190
        %v207 = vsel %vm197, %v188, %v198
        %v208 = vsel %vm197, %v189, %v200
        %v209 = vsel %vm197, %v190, %v202
        %vm210 = vcmask 1046528
        %v211 = vrot.slane %v179, 1
        %v212 = vrot.slane %v180, 1
        %v213 = vsel %vm210, %v211, %v212
        %v214 = vrot.slane %v181, 1
        %v215 = vrot.slane %v182, 1
        %v216 = vsel %vm210, %v214, %v215
        %v217 = vrot.slane %v183, 1
        %v218 = vrot.slane %v184, 1
        %v219 = vsel %vm210, %v217, %v218
        %v226 = vsel %vm210, %v212, %v211
        %v227 = vsel %vm210, %v215, %v214
        %v228 = vsel %vm210, %v218, %v217
        %v229 = vld [vmem:[%s177] sm:$0xf]
        %s230 = scalar_lea.vmem %s177, 4
        %v231 = vld [vmem:[%s230] sm:$0xf]
        %vm232 = vcmask 31744
        %v233 = vsel %vm232, %v179, 0
        %v235 = vsel %vm232, %v180, 0
        %v237 = vsel %vm232, %v181, 0
        %v239 = vsel %vm232, %v182, 0
        %v241 = vsel %vm232, %v183, 0
        %v243 = vsel %vm232, %v184, 0
        %vm245 = vcmask 1043456
        %v247 = vsel %vm245, %v231, 0
        %249 = vmatprep.subr.mxu0 0.0
        %250 = vmatpush1.msra.mxu0 %v247
        %251 = vmatprep.subr.mxu0 0.0
        %252 = vmatpush1.msra.mxu0 0.0
        %253 = vmatprep.subr.mxu0 0.0
        %254 = vmatpush1.msra.mxu0 0.0
        %255 = vmatprep.subr.mxu0 0.0
        %256 = vmatpush1.msra.mxu0 0.0
        %257 = vmatprep.subr.mxu0 0.0
        %258 = vmatpush1.msra.mxu0 0.0
        %259 = vmatprep.subr.mxu0 0.0
        %260 = vmatpush1.msra.mxu0 0.0
        %261 = vmatprep.subr.mxu0 0.0
        %262 = vmatpush1.msra.mxu0 0.0
        %263 = vmatprep.subr.mxu0 0.0
        %264 = vmatpush1.msra.mxu0 0.0
        %265 = vmatprep.subr.mxu0 0.0
        %266 = vmatpush1.msra.mxu0 0.0
        %267 = vmatprep.subr.mxu0 0.0
        %268 = vmatpush1.msra.mxu0 0.0
        %269 = vmatprep.subr.mxu0 0.0
        %270 = vmatpush1.msra.mxu0 0.0
        %271 = vmatprep.subr.mxu0 0.0
        %272 = vmatpush1.msra.mxu0 0.0
        %273 = vmatprep.subr.mxu0 0.0
        %274 = vmatpush1.msra.mxu0 0.0
        %275 = vmatprep.subr.mxu0 0.0
        %276 = vmatpush1.msra.mxu0 0.0
        %277 = vmatprep.subr.mxu0 0.0
        %278 = vmatpush1.msra.mxu0 0.0
        %279 = vmatprep.subr.mxu0 0.0
        %280 = vmatpush1.msra.mxu0 0.0
        %281 = vmatprep.subr.mxu0 0.0
        %282 = vmatpush1.msra.mxu0 0.0
        %283 = vmatprep.subr.mxu0 0.0
        %284 = vmatpush1.msra.mxu0 0.0
        %285 = vmatprep.subr.mxu0 0.0
        %286 = vmatpush1.msra.mxu0 0.0
        %287 = vmatprep.subr.mxu0 0.0
        %288 = vmatpush1.msra.mxu0 0.0
        %289 = vmatprep.subr.mxu0 0.0
        %290 = vmatpush1.msra.mxu0 0.0
        %291 = vmatprep.subr.mxu0 0.0
        %292 = vmatpush1.msra.mxu0 0.0
        %293 = vmatprep.subr.mxu0 0.0
        %294 = vmatpush1.msra.mxu0 0.0
        %295 = vmatprep.subr.mxu0 0.0
        %296 = vmatpush1.msra.mxu0 0.0
        %297 = vmatprep.subr.mxu0 0.0
        %298 = vmatpush1.msra.mxu0 0.0
        %299 = vmatprep.subr.mxu0 0.0
        %300 = vmatpush1.msra.mxu0 0.0
        %301 = vmatprep.subr.mxu0 0.0
        %302 = vmatpush1.msra.mxu0 0.0
        %303 = vmatprep.subr.mxu0 0.0
        %304 = vmatpush1.msra.mxu0 0.0
        %305 = vmatprep.subr.mxu0 0.0
        %306 = vmatpush1.msra.mxu0 0.0
        %307 = vmatprep.subr.mxu0 0.0
        %308 = vmatpush1.msra.mxu0 0.0
        %309 = vmatprep.subr.mxu0 0.0
        %310 = vmatpush1.msra.mxu0 0.0
        %311 = vmatprep.subr.mxu0 0.0
        %312 = vmatpush1.msra.mxu0 0.0
        %313 = vmatprep.mubr.f32.mxu0 0.0
        %314 = vmatmul.mubr.f32.gmra.mrb[0].mxu0 %v233
        %v315 = vpop.f32.mrb[0].mxu0
        %v316 = vadd.f32 0.0, %v315
        %v317 = vpop.f32.mrb[0].mxu0
        %318 = vmatprep.mubr.f32.mxu0 0.0
        %319 = vmatmul.mubr.f32.gmra.mrb[0].mxu0 %v235
        %v320 = vpop.f32.mrb[0].mxu0
        %v321 = vadd.f32 0.0, %v320
        %v322 = vpop.f32.mrb[0].mxu0
        %323 = vmatprep.mubr.f32.mxu0 0.0
        %324 = vmatmul.mubr.f32.gmra.mrb[0].mxu0 %v237
        %v325 = vpop.f32.mrb[0].mxu0
        %v326 = vadd.f32 0.0, %v325
        %v327 = vpop.f32.mrb[0].mxu0
        %328 = vmatprep.mubr.f32.mxu0 0.0
        %329 = vmatmul.mubr.f32.gmra.mrb[0].mxu0 %v239
        %v330 = vpop.f32.mrb[0].mxu0
        %v331 = vadd.f32 0.0, %v330
        %v332 = vpop.f32.mrb[0].mxu0
        %333 = vmatprep.mubr.f32.mxu0 0.0
        %334 = vmatmul.mubr.f32.gmra.mrb[0].mxu0 %v241
        %v335 = vpop.f32.mrb[0].mxu0
        %v336 = vadd.f32 0.0, %v335
        %v337 = vpop.f32.mrb[0].mxu0
        %338 = vmatprep.mubr.f32.mxu0 0.0
        %339 = vmatmul.mubr.f32.gmra.mrb[0].mxu0 %v243
        %v340 = vpop.f32.mrb[0].mxu0
        %v341 = vadd.f32 0.0, %v340
        %v342 = vpop.f32.mrb[0].mxu0
        %343 = vdwg.mxu0
        %v345 = vsel %vm232, %v207, 0
        %v347 = vsel %vm232, %v199, 0
        %v350 = vsel %vm232, %v208, 0
        %v352 = vsel %vm232, %v201, 0
        %v355 = vsel %vm232, %v209, 0
        %v357 = vsel %vm232, %v203, 0
        %v360 = vsel %vm245, %v229, 0
        %362 = vmatprep.subr.mxu0 0.0
        %363 = vmatpush1.msra.mxu0 %v360
        %364 = vmatprep.subr.mxu0 0.0
        %365 = vmatpush1.msra.mxu0 0.0
        %366 = vmatprep.subr.mxu0 0.0
        %367 = vmatpush1.msra.mxu0 0.0
        %368 = vmatprep.subr.mxu0 0.0
        %369 = vmatpush1.msra.mxu0 0.0
        %370 = vmatprep.subr.mxu0 0.0
        %371 = vmatpush1.msra.mxu0 0.0
        %372 = vmatprep.subr.mxu0 0.0
        %373 = vmatpush1.msra.mxu0 0.0
        %374 = vmatprep.subr.mxu0 0.0
        %375 = vmatpush1.msra.mxu0 0.0
        %376 = vmatprep.subr.mxu0 0.0
        %377 = vmatpush1.msra.mxu0 0.0
        %378 = vmatprep.subr.mxu0 0.0
        %379 = vmatpush1.msra.mxu0 0.0
        %380 = vmatprep.subr.mxu0 0.0
        %381 = vmatpush1.msra.mxu0 0.0
        %382 = vmatprep.subr.mxu0 0.0
        %383 = vmatpush1.msra.mxu0 0.0
        %384 = vmatprep.subr.mxu0 0.0
        %385 = vmatpush1.msra.mxu0 0.0
        %386 = vmatprep.subr.mxu0 0.0
        %387 = vmatpush1.msra.mxu0 0.0
        %388 = vmatprep.subr.mxu0 0.0
        %389 = vmatpush1.msra.mxu0 0.0
        %390 = vmatprep.subr.mxu0 0.0
        %391 = vmatpush1.msra.mxu0 0.0
        %392 = vmatprep.subr.mxu0 0.0
        %393 = vmatpush1.msra.mxu0 0.0
        %394 = vmatprep.subr.mxu0 0.0
        %395 = vmatpush1.msra.mxu0 0.0
        %396 = vmatprep.subr.mxu0 0.0
        %397 = vmatpush1.msra.mxu0 0.0
        %398 = vmatprep.subr.mxu0 0.0
        %399 = vmatpush1.msra.mxu0 0.0
        %400 = vmatprep.subr.mxu0 0.0
        %401 = vmatpush1.msra.mxu0 0.0
        %402 = vmatprep.subr.mxu0 0.0
        %403 = vmatpush1.msra.mxu0 0.0
        %404 = vmatprep.subr.mxu0 0.0
        %405 = vmatpush1.msra.mxu0 0.0
        %406 = vmatprep.subr.mxu0 0.0
        %407 = vmatpush1.msra.mxu0 0.0
        %408 = vmatprep.subr.mxu0 0.0
        %409 = vmatpush1.msra.mxu0 0.0
        %410 = vmatprep.subr.mxu0 0.0
        %411 = vmatpush1.msra.mxu0 0.0
        %412 = vmatprep.subr.mxu0 0.0
        %413 = vmatpush1.msra.mxu0 0.0
        %414 = vmatprep.subr.mxu0 0.0
        %415 = vmatpush1.msra.mxu0 0.0
        %416 = vmatprep.subr.mxu0 0.0
        %417 = vmatpush1.msra.mxu0 0.0
        %418 = vmatprep.subr.mxu0 0.0
        %419 = vmatpush1.msra.mxu0 0.0
        %420 = vmatprep.subr.mxu0 0.0
        %421 = vmatpush1.msra.mxu0 0.0
        %422 = vmatprep.subr.mxu0 0.0
        %423 = vmatpush1.msra.mxu0 0.0
        %424 = vmatprep.subr.mxu0 0.0
        %425 = vmatpush1.msra.mxu0 0.0
        %426 = vmatprep.mubr.f32.mxu0 0.0
        %427 = vmatmul.mubr.f32.gmra.mrb[0].mxu0 %v345
        %v428 = vpop.f32.mrb[0].mxu0
        %v429 = vadd.f32 %v316, %v428
        %v430 = vpop.f32.mrb[0].mxu0
        %431 = vmatprep.mubr.f32.mxu0 0.0
        %432 = vmatmul.mubr.f32.gmra.mrb[0].mxu0 %v347
        %v433 = vpop.f32.mrb[0].mxu0
        %v434 = vadd.f32 %v321, %v433
        %v435 = vpop.f32.mrb[0].mxu0
        %436 = vmatprep.mubr.f32.mxu0 0.0
        %437 = vmatmul.mubr.f32.gmra.mrb[0].mxu0 %v350
        %v438 = vpop.f32.mrb[0].mxu0
        %v439 = vadd.f32 %v326, %v438
        %v440 = vpop.f32.mrb[0].mxu0
        %441 = vmatprep.mubr.f32.mxu0 0.0
        %442 = vmatmul.mubr.f32.gmra.mrb[0].mxu0 %v352
        %v443 = vpop.f32.mrb[0].mxu0
        %v444 = vadd.f32 %v331, %v443
        %v445 = vpop.f32.mrb[0].mxu0
        %446 = vmatprep.mubr.f32.mxu0 0.0
        %447 = vmatmul.mubr.f32.gmra.mrb[0].mxu0 %v355
        %v448 = vpop.f32.mrb[0].mxu0
        %v449 = vadd.f32 %v336, %v448
        %v450 = vpop.f32.mrb[0].mxu0
        %451 = vmatprep.mubr.f32.mxu0 0.0
        %452 = vmatmul.mubr.f32.gmra.mrb[0].mxu0 %v357
        %v453 = vpop.f32.mrb[0].mxu0
        %v454 = vadd.f32 %v341, %v453
        %v455 = vpop.f32.mrb[0].mxu0
        %456 = vdwg.mxu0
        %s457 = scalar_lea.vmem %s177, 8
        %v458 = vld [vmem:[%s457] sm:$0xf]
        %v459 = vsel %vm232, %v213, 0
        %v462 = vsel %vm232, %v226, 0
        %v464 = vsel %vm232, %v216, 0
        %v467 = vsel %vm232, %v227, 0
        %v469 = vsel %vm232, %v219, 0
        %v472 = vsel %vm232, %v228, 0
        %v475 = vsel %vm245, %v458, 0
        %477 = vmatprep.subr.mxu0 0.0
        %478 = vmatpush1.msra.mxu0 %v475
        %479 = vmatprep.subr.mxu0 0.0
        %480 = vmatpush1.msra.mxu0 0.0
        %481 = vmatprep.subr.mxu0 0.0
        %482 = vmatpush1.msra.mxu0 0.0
        %483 = vmatprep.subr.mxu0 0.0
        %484 = vmatpush1.msra.mxu0 0.0
        %485 = vmatprep.subr.mxu0 0.0
        %486 = vmatpush1.msra.mxu0 0.0
        %487 = vmatprep.subr.mxu0 0.0
        %488 = vmatpush1.msra.mxu0 0.0
        %489 = vmatprep.subr.mxu0 0.0
        %490 = vmatpush1.msra.mxu0 0.0
        %491 = vmatprep.subr.mxu0 0.0
        %492 = vmatpush1.msra.mxu0 0.0
        %493 = vmatprep.subr.mxu0 0.0
        %494 = vmatpush1.msra.mxu0 0.0
        %495 = vmatprep.subr.mxu0 0.0
        %496 = vmatpush1.msra.mxu0 0.0
        %497 = vmatprep.subr.mxu0 0.0
        %498 = vmatpush1.msra.mxu0 0.0
        %499 = vmatprep.subr.mxu0 0.0
        %500 = vmatpush1.msra.mxu0 0.0
        %501 = vmatprep.subr.mxu0 0.0
        %502 = vmatpush1.msra.mxu0 0.0
        %503 = vmatprep.subr.mxu0 0.0
        %504 = vmatpush1.msra.mxu0 0.0
        %505 = vmatprep.subr.mxu0 0.0
        %506 = vmatpush1.msra.mxu0 0.0
        %507 = vmatprep.subr.mxu0 0.0
        %508 = vmatpush1.msra.mxu0 0.0
        %509 = vmatprep.subr.mxu0 0.0
        %510 = vmatpush1.msra.mxu0 0.0
        %511 = vmatprep.subr.mxu0 0.0
        %512 = vmatpush1.msra.mxu0 0.0
        %513 = vmatprep.subr.mxu0 0.0
        %514 = vmatpush1.msra.mxu0 0.0
        %515 = vmatprep.subr.mxu0 0.0
        %516 = vmatpush1.msra.mxu0 0.0
        %517 = vmatprep.subr.mxu0 0.0
        %518 = vmatpush1.msra.mxu0 0.0
        %519 = vmatprep.subr.mxu0 0.0
        %520 = vmatpush1.msra.mxu0 0.0
        %521 = vmatprep.subr.mxu0 0.0
        %522 = vmatpush1.msra.mxu0 0.0
        %523 = vmatprep.subr.mxu0 0.0
        %524 = vmatpush1.msra.mxu0 0.0
        %525 = vmatprep.subr.mxu0 0.0
        %526 = vmatpush1.msra.mxu0 0.0
        %527 = vmatprep.subr.mxu0 0.0
        %528 = vmatpush1.msra.mxu0 0.0
        %529 = vmatprep.subr.mxu0 0.0
        %530 = vmatpush1.msra.mxu0 0.0
        %531 = vmatprep.subr.mxu0 0.0
        %532 = vmatpush1.msra.mxu0 0.0
        %533 = vmatprep.subr.mxu0 0.0
        %534 = vmatpush1.msra.mxu0 0.0
        %535 = vmatprep.subr.mxu0 0.0
        %536 = vmatpush1.msra.mxu0 0.0
        %537 = vmatprep.subr.mxu0 0.0
        %538 = vmatpush1.msra.mxu0 0.0
        %539 = vmatprep.subr.mxu0 0.0
        %540 = vmatpush1.msra.mxu0 0.0
        %541 = vmatprep.mubr.f32.mxu0 0.0
        %542 = vmatmul.mubr.f32.gmra.mrb[0].mxu0 %v459
        %v543 = vpop.f32.mrb[0].mxu0
        %v544 = vadd.f32 0.0, %v543
        %v545 = vpop.f32.mrb[0].mxu0
        %546 = vmatprep.mubr.f32.mxu0 0.0
        %547 = vmatmul.mubr.f32.gmra.mrb[0].mxu0 %v462
        %v548 = vpop.f32.mrb[0].mxu0
        %v549 = vadd.f32 0.0, %v548
        %v550 = vpop.f32.mrb[0].mxu0
        %551 = vmatprep.mubr.f32.mxu0 0.0
        %552 = vmatmul.mubr.f32.gmra.mrb[0].mxu0 %v464
        %v553 = vpop.f32.mrb[0].mxu0
        %v554 = vadd.f32 0.0, %v553
        %v555 = vpop.f32.mrb[0].mxu0
        %556 = vmatprep.mubr.f32.mxu0 0.0
        %557 = vmatmul.mubr.f32.gmra.mrb[0].mxu0 %v467
        %v558 = vpop.f32.mrb[0].mxu0
        %v559 = vadd.f32 0.0, %v558
        %v560 = vpop.f32.mrb[0].mxu0
        %561 = vmatprep.mubr.f32.mxu0 0.0
        %562 = vmatmul.mubr.f32.gmra.mrb[0].mxu0 %v469
        %v563 = vpop.f32.mrb[0].mxu0
        %v564 = vadd.f32 0.0, %v563
        %v565 = vpop.f32.mrb[0].mxu0
        %566 = vmatprep.mubr.f32.mxu0 0.0
        %567 = vmatmul.mubr.f32.gmra.mrb[0].mxu0 %v472
        %v568 = vpop.f32.mrb[0].mxu0
        %v569 = vadd.f32 0.0, %v568
        %v570 = vpop.f32.mrb[0].mxu0
        %571 = vdwg.mxu0
        %v572 = vadd.f32 %v429, %v544
        %v573 = vadd.f32 %v434, %v549
        %v574 = vadd.f32 %v439, %v554
        %v575 = vadd.f32 %v444, %v559
        %v576 = vadd.f32 %v449, %v564
        %v577 = vadd.f32 %v454, %v569
        %vm578 = vcmask 261120
        %579 = vst.msk [vmem:[%s166] sm:$0xff] %vm578, %v572
        %580 = vst.msk [vmem:[%s166 + $0x8] sm:$0xff] %vm578, %v573
        %581 = vst.msk [vmem:[%s166 + $0x10] sm:$0xff] %vm578, %v574
        %582 = vst.msk [vmem:[%s166 + $0x18] sm:$0xff] %vm578, %v575
        %583 = vst.msk [vmem:[%s166 + $0x20] sm:$0xff] %vm578, %v576
        %584 = vst.msk [vmem:[%s166 + $0x28] sm:$0xff] %vm578, %v577
        %s585 = sand.u32 %s90, 1
        %s586 = scalar_lea.sflag [#allocation3], %s585
        %s587 = sand.u32 %s90, 1
        %s588 = smul.addr %s587, 48
        %s589 = scalar_lea.vmem [#allocation2], %s588
        // Predicated region
        $region29: #{tpu_custom_call.1} parent=27 // pred_check
          %p590 = pneg %p100
        $region30: #{tpu_custom_call.1} parent=27 // pred_check_branch
          %592 = sbr.rel (%p590) target = $region32
        $region31: #{tpu_custom_call.1} parent=27 // pred_region
          %s593 = smul.u32 3, %s20
          %s595 = ssub.s32 768, 768
          %596 = vsyncadd %s586, %s595
          %s597 = smul.addr %s593, 2
          %s598 = sadd.s32 %s21, %s597
          %s599 = smul.addr %s598, 128
          %s600 = scalar_lea.hbm %s2, %s599
          %s601 = sshll.u32 %s589, 4
          %s602 = int_to_ptr.vmem [resolvable:$true] %s601
          %607 = dma.vmem_to_hbm [thread:$0]  %s602, 768, %s600, %s586, 128, 128, 8
        $region32: #{tpu_custom_call.1} parent=27 // pred_fallthru
          _
      $region28: #{tpu_custom_call.1} parent=5 // pred_fallthru
        _
      %p608 = scmp.le.s32.totalorder 2, %s11
      // Predicated region
      $region33: #{tpu_custom_call.1} parent=5 // pred_check
        %p609 = pneg %p608
      $region34: #{tpu_custom_call.1} parent=5 // pred_check_branch
        %611 = sbr.rel (%p609) target = $region36
      $region35: #{tpu_custom_call.1} parent=5 // pred_region
        %s612 = ssub.s32 %s11, 2
        // Predicated region
        $region37: #{tpu_custom_call.1} parent=35 // pred_check
          %p613 = pneg %p106
        $region38: #{tpu_custom_call.1} parent=35 // pred_check_branch
          %615 = sbr.rel (%p613) target = $region40
        $region39: #{tpu_custom_call.1} parent=35 // pred_region
          %s616 = sand.u32 %s91, 1
          %s617 = scalar_lea.sflag [#allocation3], %s616
          %s618 = sand.u32 %s91, 1
          %s619 = smul.addr %s618, 48
          %s620 = scalar_lea.vmem [#allocation2], %s619
          %621 = dma.done %s617, 768
        $region40: #{tpu_custom_call.1} parent=35 // pred_fallthru
          _
      $region36: #{tpu_custom_call.1} parent=5 // pred_fallthru
        _
    $region6: #{tpu_custom_call.1} parent=1 // loop_footer
      %s15 = sadd.s32 1, %s11
    $region7: #{tpu_custom_call.1} parent=1 // loop_footer_branch
      %10 = sbr.rel target = $region3
    $region8: #{tpu_custom_call.1} parent=1 // loop_exit
      _
    %622 = vsyncpa [#allocation3], 1
    %s623 = scalar_lea.sflag [#allocation3], 1
    %624 = vsyncpa %s623, 1

</llo_original>
